<compile_context>
chip_gen: v7x
topology: tpu7x:2x2x1
jax: 0.10.0
libtpu: 0.0.40
codegen_flags: <defaults>
</compile_context>

<pallas_src>
import jax
import jax.numpy as jnp
from jax.experimental import pallas as pl
from jax.experimental.pallas import tpu as pltpu

_LANES = 128            # full vreg lane width (last dim maps to lanes)
_SUBLANES = 8           # sublane granularity for f32
_MAX_BLOCK_ROWS = 1024  # ~512 KiB/tile f32; 85%+ of HBM roofline, VMEM-safe on v7x


def _copy_kernel(x_ref, o_ref):
    # Pure pass-through copy: no casts, no elementwise work (keeps the single
    # vector-store slot on v5e as the only binding resource).
    o_ref[...] = x_ref[...]


def _pick_block_rows(rows: int) -> int:
    """Largest row-tile <= _MAX_BLOCK_ROWS that is (8,)-aligned and, when
    possible, divides `rows` exactly so every grid step is a full tile."""
    if rows <= _MAX_BLOCK_ROWS:
        return rows  # full-extent block: always legal, single grid step
    # Prefer an exact divisor that is a multiple of 8 (unmasked stores).
    br = _MAX_BLOCK_ROWS
    while br >= _SUBLANES:
        if rows % br == 0:
            return br
        br -= _SUBLANES
    # Fall back to the max tile; Pallas masks the ragged last tile.
    return _MAX_BLOCK_ROWS


def print_module_forward(x: jax.Array,
                         *,
                         materialize_copy: bool = True,
                         donate: bool = False) -> jax.Array:
    """JAX/Pallas equivalent of Print.forward: print shape, return x.

    materialize_copy=False is the optimal path (identity -> no kernel, zero
    HBM traffic).  materialize_copy=True runs the tiled lane-dense copy
    kernel.  donate=True additionally aliases the input buffer to the output
    (only a real win if the caller donates x at the jit boundary).
    """
    # Mimic `print(x.shape)` from the PyTorch module.  Shapes are static in
    # JAX, so under jit this fires once per compilation (trace time).
    print(tuple(x.shape))

    if not materialize_copy:
        # Identity is free: no kernel, no HBM traffic.
        return x

    total = int(x.size)
    itemsize = x.dtype.itemsize

    if total == 0 or total % _LANES != 0:
        # Odd / tiny sizes: a copy kernel buys nothing; identity is exact.
        return x

    rows = total // _LANES
    x2d = x.reshape(rows, _LANES)  # lane-dense layout: last dim = 128

    block_rows = _pick_block_rows(rows)
    n_tiles = pl.cdiv(rows, block_rows)

    extra_kwargs = {}
    if donate:
        extra_kwargs["input_output_aliases"] = {0: 0}

    y2d = pl.pallas_call(
        _copy_kernel,
        out_shape=jax.ShapeDtypeStruct((rows, _LANES), x.dtype),
        grid=(n_tiles,),
        in_specs=[pl.BlockSpec((block_rows, _LANES), lambda i: (i, 0))],
        out_specs=pl.BlockSpec((block_rows, _LANES), lambda i: (i, 0)),
        compiler_params=pltpu.CompilerParams(
            dimension_semantics=("parallel",),   # lets v7x split across 2 TCs
            vmem_limit_bytes=32 * 1024 * 1024,   # explicit, safe on v7x's 64 MiB
        ),
        cost_estimate=pl.CostEstimate(
            flops=0,
            transcendentals=0,
            bytes_accessed=2 * total * itemsize,  # pure memory op
        ),
        **extra_kwargs,
    )(x2d)

    return y2d.reshape(x.shape)


if __name__ == "__main__":
    key = jax.random.PRNGKey(0)
    # Small NCHW input consistent with a typical conv-net feature map.
    x = jax.random.normal(key, (2, 4, 16, 16), dtype=jnp.float32)

    # Exercise the Pallas copy kernel once (materialize_copy=True).
    y = print_module_forward(x, materialize_copy=True)
    y = jax.block_until_ready(y)

    assert y.shape == x.shape
    assert y.dtype == x.dtype
    assert bool(jnp.all(y == x))

    # Fast path (true identity) also preserves semantics.
    z = print_module_forward(x, materialize_copy=False)
    assert bool(jnp.all(z == x))

    print("KERNEL_OK")
</pallas_src>

<mosaic_0001>
module attributes {stable_mosaic.version = 11 : i64} {
  func.func @_copy_kernel(%arg0: i32, %arg1: memref<16x128xf32, #tpu.memory_space<vmem>>, %arg2: memref<16x128xf32, #tpu.memory_space<vmem>>) attributes {dimension_semantics = [#tpu.dimension_semantics<parallel>], iteration_bounds = array<i64: 1>, scalar_prefetch = 0 : i64, scratch_operands = 0 : i64, tpu.core_type = #tpu.core_type<tc>, window_params = [{transform_indices = @transform_0, window_bounds = array<i64: 16, 128>}, {transform_indices = @transform_1, window_bounds = array<i64: 16, 128>}]} {
    %c0 = arith.constant 0 : index
    %c0_0 = arith.constant 0 : index
    %0 = vector.load %arg1[%c0, %c0_0] : memref<16x128xf32, #tpu.memory_space<vmem>>, vector<16x128xf32>
    %c0_1 = arith.constant 0 : index
    %c0_2 = arith.constant 0 : index
    %1 = vector.load %arg2[%c0_1, %c0_2] : memref<16x128xf32, #tpu.memory_space<vmem>>, vector<16x128xf32>
    tpu.vector_store %arg2[%c0_1, %c0_2], %0 {strides = array<i32>} : memref<16x128xf32, #tpu.memory_space<vmem>>, vector<16x128xf32>,
    return
  }
  func.func @transform_0(%arg0: i32) -> (i32, i32) {
    %c0_i32 = arith.constant 0 : i32
    %c0_i32_0 = arith.constant 0 : i32
    return %arg0, %c0_i32 : i32, i32
  }
  func.func @transform_1(%arg0: i32) -> (i32, i32) {
    %c0_i32 = arith.constant 0 : i32
    %c0_i32_0 = arith.constant 0 : i32
    return %arg0, %c0_i32 : i32, i32
  }
}

</mosaic_0001>

<llo_original>
// kernel: tpu_custom_call.1
$region0: #{tpu_custom_call.1}
  #allocation0 [shape = 'u32[]', space=smem, size = 0x4, offset = 0x4, fixed_abs, tag = 'smem constant byte address 0x4 - core index']
  #allocation1 [shape = 'u32[144,128]{1,0:T(1,128)}', space=vmem, size = 0x12000, scoped, tag = 'internal scratch']
  %s0 = inlined_call_operand.hbm [shape: f32[16,128], index: 0, kind: input, shape index: {}]
  %s1 = inlined_call_operand.hbm [shape: f32[16,128], index: 1, kind: output, shape index: {}]
  %s2 = sld [smem:[#allocation0]]
  $region18: #{tpu_custom_call.1} parent=0
    _
  %s4 = ssub.s32 1, %s2
  %s5 = scalar_select 0, %s4, %s2
  $region1: #{tpu_custom_call.1} parent=0
    #allocation2 [shape = 'u8[8192]{0}', space=vmem, size = 0x2000, scoped, tag = 'input window, operand 0, single buffered']
    #allocation3 [shape = 's32[1]{0}', space=sflag, size = 0x4, scoped, tag = 'scoped memory for tpu_custom_call.1']
    #allocation4 [shape = 's32[1]{0}', space=sflag, size = 0x4, scoped, tag = 'scoped memory for tpu_custom_call.1']
    #allocation5 [shape = 'u8[8192]{0}', space=vmem, size = 0x2000, scoped, tag = 'output window, operand 0, single buffered']
    %6 = vsyncpa [#allocation3], 0
    %7 = vsyncpa [#allocation4], 0
    // Predicated region
    $region2: #{tpu_custom_call.1} parent=1 // pred_check
      _
    $region3: #{tpu_custom_call.1} parent=1 // pred_check_branch
      %9 = sbr.rel (0) target = $region5
    $region4: #{tpu_custom_call.1} parent=1 // pred_region
      %s11 = ssub.s32 256, 256
      %12 = vsyncadd [#allocation3], %s11
      %s13 = sshll.u32 [#allocation2], 4
      %s14 = int_to_ptr.vmem [resolvable:$true] %s13
      %19 = dma.hbm_to_vmem [thread:$0]  %s0, 256, %s14, [#allocation3], 128, 128, 8
    $region5: #{tpu_custom_call.1} parent=1 // pred_fallthru
      _
    // Predicated region
    $region6: #{tpu_custom_call.1} parent=1 // pred_check
      _
    $region7: #{tpu_custom_call.1} parent=1 // pred_check_branch
      %21 = sbr.rel (0) target = $region9
    $region8: #{tpu_custom_call.1} parent=1 // pred_region
      %22 = dma.done [#allocation3], 256
    $region9: #{tpu_custom_call.1} parent=1 // pred_fallthru
      _
    %v23 = vld [vmem:[#allocation2] sm:$0xff]
    %v24 = vld [vmem:[#allocation2 + $0x8] sm:$0xff]
    %25 = vst [vmem:[#allocation5] sm:$0xff] %v23
    %26 = vst [vmem:[#allocation5 + $0x8] sm:$0xff] %v24
    // Predicated region
    $region10: #{tpu_custom_call.1} parent=1 // pred_check
      _
    $region11: #{tpu_custom_call.1} parent=1 // pred_check_branch
      %28 = sbr.rel (0) target = $region13
    $region12: #{tpu_custom_call.1} parent=1 // pred_region
      %s30 = ssub.s32 256, 256
      %31 = vsyncadd [#allocation4], %s30
      %s32 = sshll.u32 [#allocation5], 4
      %s33 = int_to_ptr.vmem [resolvable:$true] %s32
      %38 = dma.vmem_to_hbm [thread:$0]  %s33, 256, %s1, [#allocation4], 128, 128, 8
    $region13: #{tpu_custom_call.1} parent=1 // pred_fallthru
      _
    // Predicated region
    $region14: #{tpu_custom_call.1} parent=1 // pred_check
      _
    $region15: #{tpu_custom_call.1} parent=1 // pred_check_branch
      %40 = sbr.rel (0) target = $region17
    $region16: #{tpu_custom_call.1} parent=1 // pred_region
      %41 = dma.done [#allocation4], 256
    $region17: #{tpu_custom_call.1} parent=1 // pred_fallthru
      _
    %42 = vsyncpa [#allocation3], 1
    %43 = vsyncpa [#allocation4], 1

</llo_original>
